<compile_context>
chip_gen: v6e
topology: v6e:2x2x1
jax: 0.10.0
libtpu: 0.0.40
codegen_flags: <defaults>
</compile_context>

<pallas_src>
import functools

import jax
import jax.numpy as jnp
import numpy as np
from jax.experimental import pallas as pl
from jax.experimental.pallas import tpu as pltpu

D_PAD = 8       # 3 coords zero-padded to 8 along the contraction axis
_BIG = 1e30     # sentinel masking padded rows / columns out of the mins


def _cdiv(a, b):
    return (a + b - 1) // b


def _round_up(a, b):
    return _cdiv(a, b) * b


def _chamfer_kernel(x_ref, yt_ref, s1_ref, s2_ref,
                    d1_acc, d2_acc, xx_scr, xxm_scr, s1_scr, s2_scr,
                    *, n_true, m_true, tn, tm_blk, tm_chunk):
    n = pl.program_id(1)
    m = pl.program_id(2)
    n_last = pl.num_programs(1) - 1
    m_last = pl.num_programs(2) - 1
    n_chunks = tm_blk // tm_chunk

    # ---- per-batch init of the fused-mean partial sums --------------------
    @pl.when(jnp.logical_and(n == 0, m == 0))
    def _init_sums():
        s1_scr[...] = jnp.zeros_like(s1_scr)
        s2_scr[...] = jnp.zeros_like(s2_scr)

    # ---- per-N-tile hoisted row norms / masks + d1 running-min init -------
    @pl.when(m == 0)
    def _init_rows():
        x = x_ref[0]                                         # (TN, 8)
        xx = jnp.sum(x * x, axis=1, keepdims=True)           # (TN, 1)
        row_ids = n * tn + jax.lax.broadcasted_iota(jnp.int32, (tn, 1), 0)
        xx_scr[...] = xx
        xxm_scr[...] = jnp.where(row_ids < n_true, xx, _BIG)
        d1_acc[...] = jnp.full_like(d1_acc, _BIG)

    # ---- per-M-block init of the cross-N column-min slots ------------------
    @pl.when(n == 0)
    def _init_cols():
        for c in range(n_chunks):
            d2_acc[m * n_chunks + c] = jnp.full((1, tm_chunk), _BIG,
                                                jnp.float32)

    # ---- hot loop over the lane chunks of this yt block --------------------
    # d(i,j) = ||x_i||^2 + ||y_j||^2 - 2 x_i.y_j = xx_i + (yy_j - h_ij)
    x2 = x_ref[0] * 2.0                                       # (TN, 8)
    xx_m = xxm_scr[...]                                       # (TN, 1)
    d1_run = d1_acc[...]                                      # (TN, 1)

    for c in range(n_chunks):
        ytc = yt_ref[0, :, c * tm_chunk:(c + 1) * tm_chunk]   # (8, TMc)
        yy = jnp.sum(ytc * ytc, axis=0, keepdims=True)        # (1, TMc)
        col_ids = (m * tm_blk + c * tm_chunk
                   + jax.lax.broadcasted_iota(jnp.int32, (1, tm_chunk), 1))
        yy_m = jnp.where(col_ids < m_true, yy, _BIG)          # (1, TMc)
        h = jax.lax.dot_general(x2, ytc, (((1,), (0,)), ((), ())),
                                preferred_element_type=jnp.float32)  # (TN,TMc)
        # Reduce inside the step: (TN,1) row-mins + (1,TMc) column-mins only.
        d1_run = jnp.minimum(d1_run,
                             jnp.min(yy_m - h, axis=1, keepdims=True))
        cmin = jnp.min(xx_m - h, axis=0, keepdims=True)       # (1, TMc)
        slot = m * n_chunks + c
        d2_acc[slot] = jnp.minimum(d2_acc[slot], cmin)

    d1_acc[...] = d1_run

    # ---- finalize d1 rows of this N-tile after the last M-block ------------
    @pl.when(m == m_last)
    def _finalize_d1():
        row_ids = n * tn + jax.lax.broadcasted_iota(jnp.int32, (tn, 1), 0)
        d1 = jnp.maximum(xx_scr[...] + d1_acc[...], 0.0)      # (TN, 1)
        r1 = jnp.where(row_ids < n_true, jnp.sqrt(d1), 0.0)
        s1_scr[...] += jnp.sum(r1, axis=0, keepdims=True)     # (1, 1)

    # ---- finalize d2 columns of this M-block after the last N-tile ---------
    @pl.when(n == n_last)
    def _finalize_d2():
        acc = jnp.zeros((1, 1), jnp.float32)
        for c in range(n_chunks):
            ytc = yt_ref[0, :, c * tm_chunk:(c + 1) * tm_chunk]
            yy = jnp.sum(ytc * ytc, axis=0, keepdims=True)    # (1, TMc)
            col_ids = (m * tm_blk + c * tm_chunk
                       + jax.lax.broadcasted_iota(jnp.int32, (1, tm_chunk), 1))
            d2 = jnp.maximum(yy + d2_acc[m * n_chunks + c], 0.0)
            r2 = jnp.where(col_ids < m_true, jnp.sqrt(d2), 0.0)
            acc = acc + jnp.sum(r2, axis=1, keepdims=True)
        s2_scr[...] += acc

    # ---- write the per-batch partial sums exactly once per batch -----------
    @pl.when(jnp.logical_and(n == n_last, m == m_last))
    def _write_out():
        s1_ref[0] = s1_scr[...]
        s2_ref[0] = s2_scr[...]


def chamfer_distance(pcs1, pcs2, *, tn=256, tm_blk=2048, tm_chunk=256):
    """pcs1: (B, N, 3), pcs2: (B, M, 3) -> scalar, matching the torch module."""
    B, N, _ = pcs1.shape
    _, M, _ = pcs2.shape

    # --- M tiling: TM_CHUNK-wide lane chunks inside large TM_BLK blocks -----
    tm_chunk = max(128, _round_up(min(tm_chunk, _round_up(M, 128)), 128))
    m_pad_c = _round_up(M, tm_chunk)
    n_m_blocks = _cdiv(m_pad_c, max(tm_blk, tm_chunk))
    TM_BLK = _round_up(_cdiv(m_pad_c, n_m_blocks), tm_chunk)
    M_pad = n_m_blocks * TM_BLK
    n_chunks = TM_BLK // tm_chunk

    # --- N tiling (independent of M now that the d2 scratch is vector-sized)
    n_pad8 = _round_up(N, 8)
    n_n_tiles = _cdiv(n_pad8, max(_round_up(tn, 8), 8))
    TN = _round_up(_cdiv(n_pad8, n_n_tiles), 8)
    N_pad = n_n_tiles * TN

    x = jnp.pad(pcs1.astype(jnp.float32),
                ((0, 0), (0, N_pad - N), (0, D_PAD - 3)))      # (B, N_pad, 8)
    y = jnp.pad(pcs2.astype(jnp.float32),
                ((0, 0), (0, M_pad - M), (0, D_PAD - 3)))      # (B, M_pad, 8)
    yt = jnp.transpose(y, (0, 2, 1))                           # (B, 8, M_pad)

    kernel = functools.partial(_chamfer_kernel, n_true=N, m_true=M,
                               tn=TN, tm_blk=TM_BLK, tm_chunk=tm_chunk)

    # VMEM budget from the actual working set (double-buffered inputs, the
    # small scratches, compiler temporaries for h / t1 / t2), clamped so the
    # same tiles also fit v7x's 64 MiB physical / 32 MiB scoped-default VMEM.
    n_slots = n_m_blocks * n_chunks
    vmem_bytes = (2 * (TN * D_PAD * 4)              # x blocks (double-buffered)
                  + 2 * (D_PAD * TM_BLK * 4)        # yt blocks (double-buffered)
                  + n_slots * 8 * tm_chunk * 4      # d2 column-min slots
                  + 3 * TN * 128 * 4                # (TN, 1) scratches (lane-padded)
                  + 2 * 8 * 128 * 4                 # (1, 1) scratches
                  + 8 * TN * tm_chunk * 4           # h/t1/t2 compiler temporaries
                  + (4 << 20))                      # headroom
    vmem_bytes = int(min(max(vmem_bytes, 16 << 20), 48 << 20))

    s1, s2 = pl.pallas_call(
        kernel,
        out_shape=(jax.ShapeDtypeStruct((B, 1, 1), jnp.float32),
                   jax.ShapeDtypeStruct((B, 1, 1), jnp.float32)),
        grid=(B, n_n_tiles, n_m_blocks),
        in_specs=[pl.BlockSpec((1, TN, D_PAD), lambda b, n, m: (b, n, 0)),
                  pl.BlockSpec((1, D_PAD, TM_BLK), lambda b, n, m: (b, 0, m))],
        out_specs=(pl.BlockSpec((1, 1, 1), lambda b, n, m: (b, 0, 0)),
                   pl.BlockSpec((1, 1, 1), lambda b, n, m: (b, 0, 0))),
        scratch_shapes=[
            pltpu.VMEM((TN, 1), jnp.float32),                       # d1 row-min
            pltpu.VMEM((n_slots, 1, tm_chunk), jnp.float32),        # d2 col-min
            pltpu.VMEM((TN, 1), jnp.float32),                       # ||x||^2
            pltpu.VMEM((TN, 1), jnp.float32),                       # masked ||x||^2
            pltpu.VMEM((1, 1), jnp.float32),                        # s1 partial
            pltpu.VMEM((1, 1), jnp.float32),                        # s2 partial
        ],
        compiler_params=pltpu.CompilerParams(
            # batch is embarrassingly parallel (megacore); the N/M block axes
            # carry running-min accumulators so they must stay "arbitrary".
            dimension_semantics=("parallel", "arbitrary", "arbitrary"),
            vmem_limit_bytes=vmem_bytes),
    )(x, yt)

    dist1 = jnp.sum(s1) / (B * N)     # mean over all B*N points of sqrt(d1)
    dist2 = jnp.sum(s2) / (B * M)     # mean over all B*M points of sqrt(d2)
    return (dist1 + dist2) / 2.0


def _chamfer_reference(pcs1, pcs2):
    # pure-JAX reference (diff-based) for correctness checking
    diff = pcs1[:, :, None, :] - pcs2[:, None, :, :]          # (B, N, M, 3)
    d = jnp.sum(diff * diff, axis=-1)                          # (B, N, M)
    d1 = jnp.min(d, axis=2)                                    # (B, N)
    d2 = jnp.min(d, axis=1)                                    # (B, M)
    return (jnp.mean(jnp.sqrt(d1)) + jnp.mean(jnp.sqrt(d2))) / 2.0


if __name__ == "__main__":
    key = jax.random.PRNGKey(0)
    k1, k2, k3, k4 = jax.random.split(key, 4)

    # Small shapes (single N-tile, single M-block, single chunk).
    B, N, M = 2, 64, 48
    pcs1 = jax.random.normal(k1, (B, N, 3), dtype=jnp.float32)
    pcs2 = jax.random.normal(k2, (B, M, 3), dtype=jnp.float32)
    out = jax.block_until_ready(chamfer_distance(pcs1, pcs2))
    ref = jax.block_until_ready(_chamfer_reference(pcs1, pcs2))
    # The ||x||^2 + ||y||^2 - 2x.y expansion loses a little relative precision
    # vs the diff-based reference; tolerance reflects that.
    np.testing.assert_allclose(np.asarray(out), np.asarray(ref),
                               rtol=5e-5, atol=1e-5)

    # Shapes exercising multiple N-tiles, multiple M-blocks, multiple lane
    # chunks per block, and the row/column padding masks.
    B2, N2, M2 = 2, 317, 291
    pcs1b = jax.random.normal(k3, (B2, N2, 3), dtype=jnp.float32)
    pcs2b = jax.random.normal(k4, (B2, M2, 3), dtype=jnp.float32)
    outb = jax.block_until_ready(
        chamfer_distance(pcs1b, pcs2b, tn=128, tm_blk=256, tm_chunk=128))
    refb = jax.block_until_ready(_chamfer_reference(pcs1b, pcs2b))
    np.testing.assert_allclose(np.asarray(outb), np.asarray(refb),
                               rtol=5e-5, atol=1e-5)

    print("KERNEL_OK")
</pallas_src>

<mosaic_0001>
module attributes {stable_mosaic.version = 11 : i64} {
  func.func @_chamfer_kernel(%arg0: i32, %arg1: i32, %arg2: i32, %arg3: memref<1x64x8xf32, #tpu.memory_space<vmem>>, %arg4: memref<1x8x128xf32, #tpu.memory_space<vmem>>, %arg5: memref<1x1x1xf32, #tpu.memory_space<vmem>>, %arg6: memref<1x1x1xf32, #tpu.memory_space<vmem>>, %arg7: memref<64x1xf32, #tpu.memory_space<vmem>>, %arg8: memref<1x1x128xf32, #tpu.memory_space<vmem>>, %arg9: memref<64x1xf32, #tpu.memory_space<vmem>>, %arg10: memref<64x1xf32, #tpu.memory_space<vmem>>, %arg11: memref<1x1xf32, #tpu.memory_space<vmem>>, %arg12: memref<1x1xf32, #tpu.memory_space<vmem>>) attributes {dimension_semantics = [#tpu.dimension_semantics<parallel>, #tpu.dimension_semantics<arbitrary>, #tpu.dimension_semantics<arbitrary>], iteration_bounds = array<i64: 2, 1, 1>, scalar_prefetch = 0 : i64, scratch_operands = 6 : i64, tpu.core_type = #tpu.core_type<tc>, window_params = [{transform_indices = @transform_0, window_bounds = array<i64: 1, 64, 8>}, {transform_indices = @transform_1, window_bounds = array<i64: 1, 8, 128>}, {transform_indices = @transform_2, window_bounds = array<i64: 1, 1, 1>}, {transform_indices = @transform_3, window_bounds = array<i64: 1, 1, 1>}]} {
    %c0_i32 = arith.constant 0 : i32
    %0 = arith.cmpi eq, %arg1, %c0_i32 : i32
    %c0_i32_0 = arith.constant 0 : i32
    %1 = arith.cmpi eq, %arg2, %c0_i32_0 : i32
    %2 = arith.andi %0, %1 : i1
    %3 = arith.extui %2 : i1 to i32
    %c0_i32_1 = arith.constant 0 : i32
    %4 = arith.cmpi ne, %3, %c0_i32_1 : i32
    scf.if %4 {
      %cst_35 = arith.constant 0.000000e+00 : f32
      %63 = vector.broadcast %cst_35 : f32 to vector<1x1xf32>
      %c0_36 = arith.constant 0 : index
      %c0_37 = arith.constant 0 : index
      %64 = vector.load %arg11[%c0_36, %c0_37] : memref<1x1xf32, #tpu.memory_space<vmem>>, vector<1x1xf32>
      tpu.vector_store %arg11[%c0_36, %c0_37], %63 {strides = array<i32>} : memref<1x1xf32, #tpu.memory_space<vmem>>, vector<1x1xf32>,
      %cst_38 = arith.constant 0.000000e+00 : f32
      %65 = vector.broadcast %cst_38 : f32 to vector<1x1xf32>
      %c0_39 = arith.constant 0 : index
      %c0_40 = arith.constant 0 : index
      %66 = vector.load %arg12[%c0_39, %c0_40] : memref<1x1xf32, #tpu.memory_space<vmem>>, vector<1x1xf32>
      tpu.vector_store %arg12[%c0_39, %c0_40], %65 {strides = array<i32>} : memref<1x1xf32, #tpu.memory_space<vmem>>, vector<1x1xf32>,
    } else {
    }
    %c0_i32_2 = arith.constant 0 : i32
    %5 = arith.cmpi eq, %arg2, %c0_i32_2 : i32
    %6 = arith.extui %5 : i1 to i32
    %c0_i32_3 = arith.constant 0 : i32
    %7 = arith.cmpi ne, %6, %c0_i32_3 : i32
    scf.if %7 {
      %c0_35 = arith.constant 0 : index
      %c0_36 = arith.constant 0 : index
      %c0_37 = arith.constant 0 : index
      %63 = vector.load %arg3[%c0_35, %c0_36, %c0_37] : memref<1x64x8xf32, #tpu.memory_space<vmem>>, vector<1x64x8xf32>
      %64 = vector.shape_cast %63 : vector<1x64x8xf32> to vector<64x8xf32>
      %65 = arith.mulf %64, %64 : vector<64x8xf32>
      %cst_38 = arith.constant dense<0.000000e+00> : vector<64xf32>
      %66 = vector.multi_reduction <add>, %65, %cst_38 [1] : vector<64x8xf32> to vector<64xf32>
      %67 = vector.shape_cast %66 : vector<64xf32> to vector<64x1xf32>
      %c64_i32 = arith.constant 64 : i32
      %68 = arith.muli %arg1, %c64_i32 : i32
      %69 = tpu.iota {dimensions = array<i32: 0>} : vector<64x1xi32>
      %70 = vector.broadcast %68 : i32 to vector<64x1xi32>
      %71 = arith.addi %70, %69 : vector<64x1xi32>
      %c0_39 = arith.constant 0 : index
      %c0_40 = arith.constant 0 : index
      %72 = vector.load %arg9[%c0_39, %c0_40] : memref<64x1xf32, #tpu.memory_space<vmem>>, vector<64x1xf32>
      tpu.vector_store %arg9[%c0_39, %c0_40], %67 {strides = array<i32>} : memref<64x1xf32, #tpu.memory_space<vmem>>, vector<64x1xf32>,
      %c64_i32_41 = arith.constant 64 : i32
      %73 = vector.broadcast %c64_i32_41 : i32 to vector<64x1xi32>
      %74 = arith.cmpi slt, %71, %73 : vector<64x1xi32>
      %cst_42 = arith.constant 1.000000e+30 : f32
      %75 = vector.broadcast %cst_42 : f32 to vector<64x1xf32>
      %76 = arith.select %74, %67, %75 : vector<64x1xi1>, vector<64x1xf32>
      %c0_43 = arith.constant 0 : index
      %c0_44 = arith.constant 0 : index
      %77 = vector.load %arg10[%c0_43, %c0_44] : memref<64x1xf32, #tpu.memory_space<vmem>>, vector<64x1xf32>
      tpu.vector_store %arg10[%c0_43, %c0_44], %76 {strides = array<i32>} : memref<64x1xf32, #tpu.memory_space<vmem>>, vector<64x1xf32>,
      %cst_45 = arith.constant 1.000000e+30 : f32
      %78 = vector.broadcast %cst_45 : f32 to vector<64x1xf32>
      %c0_46 = arith.constant 0 : index
      %c0_47 = arith.constant 0 : index
      %79 = vector.load %arg7[%c0_46, %c0_47] : memref<64x1xf32, #tpu.memory_space<vmem>>, vector<64x1xf32>
      tpu.vector_store %arg7[%c0_46, %c0_47], %78 {strides = array<i32>} : memref<64x1xf32, #tpu.memory_space<vmem>>, vector<64x1xf32>,
    } else {
    }
    %c0_i32_4 = arith.constant 0 : i32
    %8 = arith.cmpi eq, %arg1, %c0_i32_4 : i32
    %9 = arith.extui %8 : i1 to i32
    %c0_i32_5 = arith.constant 0 : i32
    %10 = arith.cmpi ne, %9, %c0_i32_5 : i32
    scf.if %10 {
      %cst_35 = arith.constant 1.000000e+30 : f32
      %63 = vector.broadcast %cst_35 : f32 to vector<1x128xf32>
      %c1_i32_36 = arith.constant 1 : i32
      %64 = arith.muli %arg2, %c1_i32_36 : i32
      %c0_i32_37 = arith.constant 0 : i32
      %65 = arith.addi %64, %c0_i32_37 : i32
      %66 = arith.index_cast %65 : i32 to index
      %c0_38 = arith.constant 0 : index
      %c0_39 = arith.constant 0 : index
      %67 = vector.load %arg8[%66, %c0_38, %c0_39] : memref<1x1x128xf32, #tpu.memory_space<vmem>>, vector<1x1x128xf32>
      %68 = vector.shape_cast %67 : vector<1x1x128xf32> to vector<1x128xf32>
      %69 = vector.shape_cast %63 : vector<1x128xf32> to vector<1x1x128xf32>
      tpu.vector_store %arg8[%66, %c0_38, %c0_39], %69 {strides = array<i32>} : memref<1x1x128xf32, #tpu.memory_space<vmem>>, vector<1x1x128xf32>,
    } else {
    }
    %c0 = arith.constant 0 : index
    %c0_6 = arith.constant 0 : index
    %c0_7 = arith.constant 0 : index
    %11 = vector.load %arg3[%c0, %c0_6, %c0_7] : memref<1x64x8xf32, #tpu.memory_space<vmem>>, vector<1x64x8xf32>
    %12 = vector.shape_cast %11 : vector<1x64x8xf32> to vector<64x8xf32>
    %cst = arith.constant 2.000000e+00 : f32
    %13 = vector.broadcast %cst : f32 to vector<64x8xf32>
    %14 = arith.mulf %12, %13 : vector<64x8xf32>
    %c0_8 = arith.constant 0 : index
    %c0_9 = arith.constant 0 : index
    %15 = vector.load %arg10[%c0_8, %c0_9] : memref<64x1xf32, #tpu.memory_space<vmem>>, vector<64x1xf32>
    %c0_10 = arith.constant 0 : index
    %c0_11 = arith.constant 0 : index
    %16 = vector.load %arg7[%c0_10, %c0_11] : memref<64x1xf32, #tpu.memory_space<vmem>>, vector<64x1xf32>
    %c0_12 = arith.constant 0 : index
    %c0_13 = arith.constant 0 : index
    %c0_14 = arith.constant 0 : index
    %17 = vector.load %arg4[%c0_12, %c0_13, %c0_14] : memref<1x8x128xf32, #tpu.memory_space<vmem>>, vector<1x8x128xf32>
    %18 = vector.shape_cast %17 : vector<1x8x128xf32> to vector<8x128xf32>
    %19 = arith.mulf %18, %18 : vector<8x128xf32>
    %cst_15 = arith.constant dense<0.000000e+00> : vector<128xf32>
    %20 = vector.multi_reduction <add>, %19, %cst_15 [0] : vector<8x128xf32> to vector<128xf32>
    %21 = vector.shape_cast %20 : vector<128xf32> to vector<1x128xf32>
    %c128_i32 = arith.constant 128 : i32
    %22 = arith.muli %arg2, %c128_i32 : i32
    %c0_i32_16 = arith.constant 0 : i32
    %23 = arith.addi %22, %c0_i32_16 : i32
    %24 = tpu.iota {dimensions = array<i32: 1>} : vector<1x128xi32>
    %25 = vector.broadcast %23 : i32 to vector<1x128xi32>
    %26 = arith.addi %25, %24 : vector<1x128xi32>
    %c48_i32 = arith.constant 48 : i32
    %27 = vector.broadcast %c48_i32 : i32 to vector<1x128xi32>
    %28 = arith.cmpi slt, %26, %27 : vector<1x128xi32>
    %cst_17 = arith.constant 1.000000e+30 : f32
    %29 = vector.broadcast %cst_17 : f32 to vector<1x128xf32>
    %30 = arith.select %28, %21, %29 : vector<1x128xi1>, vector<1x128xf32>
    %cst_18 = arith.constant dense<0.000000e+00> : vector<64x128xf32>
    %31 = tpu.matmul %14, %18, %cst_18 {dimension_numbers = #tpu.dot_dimension_numbers<[1], [0], [0], [1], [0, 0, 1, 1], [], []>} : vector<64x8xf32>, vector<8x128xf32>, vector<64x128xf32> -> vector<64x128xf32>
    %32 = vector.broadcast %30 : vector<1x128xf32> to vector<64x128xf32>
    %33 = arith.subf %32, %31 : vector<64x128xf32>
    %cst_19 = arith.constant dense<0x7F800000> : vector<64xf32>
    %34 = vector.multi_reduction <minimumf>, %33, %cst_19 [1] : vector<64x128xf32> to vector<64xf32>
    %35 = vector.shape_cast %34 : vector<64xf32> to vector<64x1xf32>
    %36 = arith.minimumf %16, %35 : vector<64x1xf32>
    %37 = vector.broadcast %15 : vector<64x1xf32> to vector<64x128xf32>
    %38 = arith.subf %37, %31 : vector<64x128xf32>
    %cst_20 = arith.constant dense<0x7F800000> : vector<128xf32>
    %39 = vector.multi_reduction <minimumf>, %38, %cst_20 [0] : vector<64x128xf32> to vector<128xf32>
    %40 = vector.shape_cast %39 : vector<128xf32> to vector<1x128xf32>
    %c1_i32 = arith.constant 1 : i32
    %41 = arith.muli %arg2, %c1_i32 : i32
    %c0_i32_21 = arith.constant 0 : i32
    %42 = arith.addi %41, %c0_i32_21 : i32
    %43 = arith.index_cast %42 : i32 to index
    %c0_22 = arith.constant 0 : index
    %c0_23 = arith.constant 0 : index
    %44 = vector.load %arg8[%43, %c0_22, %c0_23] : memref<1x1x128xf32, #tpu.memory_space<vmem>>, vector<1x1x128xf32>
    %45 = vector.shape_cast %44 : vector<1x1x128xf32> to vector<1x128xf32>
    %46 = arith.minimumf %45, %40 : vector<1x128xf32>
    %47 = arith.index_cast %42 : i32 to index
    %c0_24 = arith.constant 0 : index
    %c0_25 = arith.constant 0 : index
    %48 = vector.load %arg8[%47, %c0_24, %c0_25] : memref<1x1x128xf32, #tpu.memory_space<vmem>>, vector<1x1x128xf32>
    %49 = vector.shape_cast %48 : vector<1x1x128xf32> to vector<1x128xf32>
    %50 = vector.shape_cast %46 : vector<1x128xf32> to vector<1x1x128xf32>
    tpu.vector_store %arg8[%47, %c0_24, %c0_25], %50 {strides = array<i32>} : memref<1x1x128xf32, #tpu.memory_space<vmem>>, vector<1x1x128xf32>,
    %c0_26 = arith.constant 0 : index
    %c0_27 = arith.constant 0 : index
    %51 = vector.load %arg7[%c0_26, %c0_27] : memref<64x1xf32, #tpu.memory_space<vmem>>, vector<64x1xf32>
    tpu.vector_store %arg7[%c0_26, %c0_27], %36 {strides = array<i32>} : memref<64x1xf32, #tpu.memory_space<vmem>>, vector<64x1xf32>,
    %c0_i32_28 = arith.constant 0 : i32
    %52 = arith.cmpi eq, %arg2, %c0_i32_28 : i32
    %53 = arith.extui %52 : i1 to i32
    %c0_i32_29 = arith.constant 0 : i32
    %54 = arith.cmpi ne, %53, %c0_i32_29 : i32
    scf.if %54 {
      %c64_i32 = arith.constant 64 : i32
      %63 = arith.muli %arg1, %c64_i32 : i32
      %64 = tpu.iota {dimensions = array<i32: 0>} : vector<64x1xi32>
      %65 = vector.broadcast %63 : i32 to vector<64x1xi32>
      %66 = arith.addi %65, %64 : vector<64x1xi32>
      %c0_35 = arith.constant 0 : index
      %c0_36 = arith.constant 0 : index
      %67 = vector.load %arg9[%c0_35, %c0_36] : memref<64x1xf32, #tpu.memory_space<vmem>>, vector<64x1xf32>
      %c0_37 = arith.constant 0 : index
      %c0_38 = arith.constant 0 : index
      %68 = vector.load %arg7[%c0_37, %c0_38] : memref<64x1xf32, #tpu.memory_space<vmem>>, vector<64x1xf32>
      %69 = arith.addf %67, %68 : vector<64x1xf32>
      %cst_39 = arith.constant 0.000000e+00 : f32
      %70 = vector.broadcast %cst_39 : f32 to vector<64x1xf32>
      %71 = arith.maximumf %69, %70 : vector<64x1xf32>
      %c64_i32_40 = arith.constant 64 : i32
      %72 = vector.broadcast %c64_i32_40 : i32 to vector<64x1xi32>
      %73 = arith.cmpi slt, %66, %72 : vector<64x1xi32>
      %74 = math.sqrt %71 : vector<64x1xf32>
      %cst_41 = arith.constant 0.000000e+00 : f32
      %75 = vector.broadcast %cst_41 : f32 to vector<64x1xf32>
      %76 = arith.select %73, %74, %75 : vector<64x1xi1>, vector<64x1xf32>
      %c0_42 = arith.constant 0 : index
      %c0_43 = arith.constant 0 : index
      %77 = vector.load %arg11[%c0_42, %c0_43] : memref<1x1xf32, #tpu.memory_space<vmem>>, vector<1x1xf32>
      %cst_44 = arith.constant dense<0.000000e+00> : vector<1xf32>
      %78 = vector.multi_reduction <add>, %76, %cst_44 [0] : vector<64x1xf32> to vector<1xf32>
      %79 = vector.shape_cast %78 : vector<1xf32> to vector<1x1xf32>
      %80 = arith.addf %77, %79 : vector<1x1xf32>
      %c0_45 = arith.constant 0 : index
      %c0_46 = arith.constant 0 : index
      %81 = vector.load %arg11[%c0_45, %c0_46] : memref<1x1xf32, #tpu.memory_space<vmem>>, vector<1x1xf32>
      tpu.vector_store %arg11[%c0_45, %c0_46], %80 {strides = array<i32>} : memref<1x1xf32, #tpu.memory_space<vmem>>, vector<1x1xf32>,
    } else {
    }
    %c0_i32_30 = arith.constant 0 : i32
    %55 = arith.cmpi eq, %arg1, %c0_i32_30 : i32
    %56 = arith.extui %55 : i1 to i32
    %c0_i32_31 = arith.constant 0 : i32
    %57 = arith.cmpi ne, %56, %c0_i32_31 : i32
    scf.if %57 {
      %cst_35 = arith.constant 0.000000e+00 : f32
      %63 = vector.broadcast %cst_35 : f32 to vector<1x1xf32>
      %c0_36 = arith.constant 0 : index
      %c0_37 = arith.constant 0 : index
      %c0_38 = arith.constant 0 : index
      %64 = vector.load %arg4[%c0_36, %c0_37, %c0_38] : memref<1x8x128xf32, #tpu.memory_space<vmem>>, vector<1x8x128xf32>
      %65 = vector.shape_cast %64 : vector<1x8x128xf32> to vector<8x128xf32>
      %66 = arith.mulf %65, %65 : vector<8x128xf32>
      %cst_39 = arith.constant dense<0.000000e+00> : vector<128xf32>
      %67 = vector.multi_reduction <add>, %66, %cst_39 [0] : vector<8x128xf32> to vector<128xf32>
      %68 = vector.shape_cast %67 : vector<128xf32> to vector<1x128xf32>
      %c128_i32_40 = arith.constant 128 : i32
      %69 = arith.muli %arg2, %c128_i32_40 : i32
      %c0_i32_41 = arith.constant 0 : i32
      %70 = arith.addi %69, %c0_i32_41 : i32
      %71 = tpu.iota {dimensions = array<i32: 1>} : vector<1x128xi32>
      %72 = vector.broadcast %70 : i32 to vector<1x128xi32>
      %73 = arith.addi %72, %71 : vector<1x128xi32>
      %c1_i32_42 = arith.constant 1 : i32
      %74 = arith.muli %arg2, %c1_i32_42 : i32
      %c0_i32_43 = arith.constant 0 : i32
      %75 = arith.addi %74, %c0_i32_43 : i32
      %76 = arith.index_cast %75 : i32 to index
      %c0_44 = arith.constant 0 : index
      %c0_45 = arith.constant 0 : index
      %77 = vector.load %arg8[%76, %c0_44, %c0_45] : memref<1x1x128xf32, #tpu.memory_space<vmem>>, vector<1x1x128xf32>
      %78 = vector.shape_cast %77 : vector<1x1x128xf32> to vector<1x128xf32>
      %79 = arith.addf %68, %78 : vector<1x128xf32>
      %cst_46 = arith.constant 0.000000e+00 : f32
      %80 = vector.broadcast %cst_46 : f32 to vector<1x128xf32>
      %81 = arith.maximumf %79, %80 : vector<1x128xf32>
      %c48_i32_47 = arith.constant 48 : i32
      %82 = vector.broadcast %c48_i32_47 : i32 to vector<1x128xi32>
      %83 = arith.cmpi slt, %73, %82 : vector<1x128xi32>
      %84 = math.sqrt %81 : vector<1x128xf32>
      %cst_48 = arith.constant 0.000000e+00 : f32
      %85 = vector.broadcast %cst_48 : f32 to vector<1x128xf32>
      %86 = arith.select %83, %84, %85 : vector<1x128xi1>, vector<1x128xf32>
      %cst_49 = arith.constant dense<0.000000e+00> : vector<1xf32>
      %87 = vector.multi_reduction <add>, %86, %cst_49 [1] : vector<1x128xf32> to vector<1xf32>
      %88 = vector.shape_cast %87 : vector<1xf32> to vector<1x1xf32>
      %89 = arith.addf %63, %88 : vector<1x1xf32>
      %c0_50 = arith.constant 0 : index
      %c0_51 = arith.constant 0 : index
      %90 = vector.load %arg12[%c0_50, %c0_51] : memref<1x1xf32, #tpu.memory_space<vmem>>, vector<1x1xf32>
      %91 = arith.addf %90, %89 : vector<1x1xf32>
      %c0_52 = arith.constant 0 : index
      %c0_53 = arith.constant 0 : index
      %92 = vector.load %arg12[%c0_52, %c0_53] : memref<1x1xf32, #tpu.memory_space<vmem>>, vector<1x1xf32>
      tpu.vector_store %arg12[%c0_52, %c0_53], %91 {strides = array<i32>} : memref<1x1xf32, #tpu.memory_space<vmem>>, vector<1x1xf32>,
    } else {
    }
    %c0_i32_32 = arith.constant 0 : i32
    %58 = arith.cmpi eq, %arg1, %c0_i32_32 : i32
    %c0_i32_33 = arith.constant 0 : i32
    %59 = arith.cmpi eq, %arg2, %c0_i32_33 : i32
    %60 = arith.andi %58, %59 : i1
    %61 = arith.extui %60 : i1 to i32
    %c0_i32_34 = arith.constant 0 : i32
    %62 = arith.cmpi ne, %61, %c0_i32_34 : i32
    scf.if %62 {
      %c0_35 = arith.constant 0 : index
      %c0_36 = arith.constant 0 : index
      %63 = vector.load %arg11[%c0_35, %c0_36] : memref<1x1xf32, #tpu.memory_space<vmem>>, vector<1x1xf32>
      %c0_37 = arith.constant 0 : index
      %c0_38 = arith.constant 0 : index
      %c0_39 = arith.constant 0 : index
      %64 = vector.load %arg5[%c0_37, %c0_38, %c0_39] : memref<1x1x1xf32, #tpu.memory_space<vmem>>, vector<1x1x1xf32>
      %65 = vector.shape_cast %64 : vector<1x1x1xf32> to vector<1x1xf32>
      %66 = vector.shape_cast %63 : vector<1x1xf32> to vector<1x1x1xf32>
      tpu.vector_store %arg5[%c0_37, %c0_38, %c0_39], %66 {strides = array<i32>} : memref<1x1x1xf32, #tpu.memory_space<vmem>>, vector<1x1x1xf32>,
      %c0_40 = arith.constant 0 : index
      %c0_41 = arith.constant 0 : index
      %67 = vector.load %arg12[%c0_40, %c0_41] : memref<1x1xf32, #tpu.memory_space<vmem>>, vector<1x1xf32>
      %c0_42 = arith.constant 0 : index
      %c0_43 = arith.constant 0 : index
      %c0_44 = arith.constant 0 : index
      %68 = vector.load %arg6[%c0_42, %c0_43, %c0_44] : memref<1x1x1xf32, #tpu.memory_space<vmem>>, vector<1x1x1xf32>
      %69 = vector.shape_cast %68 : vector<1x1x1xf32> to vector<1x1xf32>
      %70 = vector.shape_cast %67 : vector<1x1xf32> to vector<1x1x1xf32>
      tpu.vector_store %arg6[%c0_42, %c0_43, %c0_44], %70 {strides = array<i32>} : memref<1x1x1xf32, #tpu.memory_space<vmem>>, vector<1x1x1xf32>,
    } else {
    }
    return
  }
  func.func @transform_0(%arg0: i32, %arg1: i32, %arg2: i32) -> (i32, i32, i32) {
    %c0_i32 = arith.constant 0 : i32
    %c0_i32_0 = arith.constant 0 : i32
    return %arg0, %arg1, %c0_i32 : i32, i32, i32
  }
  func.func @transform_1(%arg0: i32, %arg1: i32, %arg2: i32) -> (i32, i32, i32) {
    %c0_i32 = arith.constant 0 : i32
    %c0_i32_0 = arith.constant 0 : i32
    return %arg0, %c0_i32, %arg2 : i32, i32, i32
  }
  func.func @transform_2(%arg0: i32, %arg1: i32, %arg2: i32) -> (i32, i32, i32) {
    %c0_i32 = arith.constant 0 : i32
    %c0_i32_0 = arith.constant 0 : i32
    %c0_i32_1 = arith.constant 0 : i32
    return %arg0, %c0_i32, %c0_i32_0 : i32, i32, i32
  }
  func.func @transform_3(%arg0: i32, %arg1: i32, %arg2: i32) -> (i32, i32, i32) {
    %c0_i32 = arith.constant 0 : i32
    %c0_i32_0 = arith.constant 0 : i32
    %c0_i32_1 = arith.constant 0 : i32
    return %arg0, %c0_i32, %c0_i32_0 : i32, i32, i32
  }
}

</mosaic_0001>

<llo_original>
// kernel: tpu_custom_call.1
$region0: #{tpu_custom_call.1}
  #allocation0 [shape = 'u32[]', space=smem, size = 0x4, offset = 0x4, fixed_abs, tag = 'smem constant byte address 0x4 - core index']
  #allocation1 [shape = 'u32[144,128]{1,0:T(1,128)}', space=vmem, size = 0x12000, scoped, tag = 'internal scratch']
  #allocation2 [shape = 'f32[64,1]{1,0:T(8,128)}', space=vmem, size = 0x8000, scoped, tag = 'scratch operand']
  #allocation3 [shape = 'f32[1,1,128]{2,1,0:T(1,128)}', space=vmem, size = 0x200, scoped, tag = 'scratch operand']
  #allocation4 [shape = 'f32[64,1]{1,0:T(8,128)}', space=vmem, size = 0x8000, scoped, tag = 'scratch operand']
  #allocation5 [shape = 'f32[64,1]{1,0:T(8,128)}', space=vmem, size = 0x8000, scoped, tag = 'scratch operand']
  #allocation6 [shape = 'f32[1,1]{1,0:T(1,128)}', space=vmem, size = 0x200, scoped, tag = 'scratch operand']
  #allocation7 [shape = 'f32[1,1]{1,0:T(1,128)}', space=vmem, size = 0x200, scoped, tag = 'scratch operand']
  %s0 = inlined_call_operand.vmem [shape: f32[2,64,8], index: 0, kind: input, shape index: {}]
  %s1 = inlined_call_operand.vmem [shape: f32[2,8,128], index: 1, kind: input, shape index: {}]
  %s2 = inlined_call_operand.vmem [shape: f32[2,1,1], index: 2, kind: output, shape index: {0}]
  %s3 = inlined_call_operand.vmem [shape: f32[2,1,1], index: 3, kind: output, shape index: {1}]
  %4 = xla_tuple %s2, %s3
  %s5 = sld [smem:[#allocation0]]
  $region73: #{tpu_custom_call.1} parent=0
    _
  %s7 = ssub.s32 1, %s5
  %s8 = scalar_select 0, %s7, %s5
  loop: start=0, step=1, limit=4
  $region2: #{tpu_custom_call.1} parent=0 // loop_pre_header
    _
  $region3: #{tpu_custom_call.1} parent=0 // loop_header
    %s10 = sphi 0, %s14
    %p11 = scmp.ge.s32.totalorder %s10, 4
    %s17 = sphi 0, %s36
    %s18 = sphi 0, %s32
    %s19 = sphi 0, %s28
    %s20 = sphi 0, %s17
    %s21 = sphi 0, %s18
    %s22 = sphi 0, %s19
    %s23 = sphi 0, %s20
    %s24 = sphi 0, %s21
    %s25 = sphi 0, %s22
    %s41 = sphi 0, %s43
    %s44 = sphi 0, %s41
    %s45 = sphi 0, %s44
    %s61 = sphi 0, %s45
    %s69 = sphi 0, %s71
    %s72 = sphi 0, %s69
    %s73 = sphi 0, %s72
    %s89 = sphi 0, %s73
    %s95 = sphi 0, %s97
    %s98 = sphi 0, %s95
    %s99 = sphi 0, %s98
    %s115 = sphi 0, %s99
    %s121 = sphi 0, %s123
    %s124 = sphi 0, %s121
    %s125 = sphi 0, %s124
    %s141 = sphi 0, %s125
  $region4: #{tpu_custom_call.1} parent=0 // loop_header_branch
    %13 = sbr.rel (%p11) target = $region8
  $region5: #{tpu_custom_call.1} parent=0 // loop_body
    %s15 = ssub.s32 %s10, 1
    %s16 = ssub.s32 %s10, 2
    %s26 = sadd.s32 1, %s19
    %p27 = scmp.ge.s32.totalorder %s26, 1
    %s28 = scalar_select %p27, 0, %s26
    %s29 = sadd.s32 1, %s18
    %s30 = scalar_select %p27, %s29, %s18
    %p31 = scmp.ge.s32.totalorder %s30, 1
    %s32 = scalar_select %p31, 0, %s30
    %s33 = sadd.s32 1, %s17
    %s34 = scalar_select %p31, %s33, %s17
    %p35 = scmp.ge.s32.totalorder %s34, 2
    %s36 = scalar_select %p35, 0, %s34
    %s37 = ssub.s32 %s17, %s36
    %s38 = ssub.s32 %s18, %s32
    %s39 = sor.u32 %s37, %s38
    %p40 = scmp.eq.s32.totalorder %s39, 0
    %s42 = sadd.s32 %s41, 1
    %s43 = scalar_select %p40, %s41, %s42
    %p46 = pneg %p40
    %p47 = scmp.eq.s32.totalorder %s10, 1
    %p48 = por %p46, %p47
    %p49 = scmp.ne.s32.totalorder %s41, %s44
    %p50 = scmp.eq.s32.totalorder %s10, 0
    %p51 = por %p49, %p50
    %p52 = scmp.ne.s32.totalorder %s41, %s44
    %p53 = scmp.eq.s32.totalorder %s15, 1
    %p54 = por %p52, %p53
    %p55 = scmp.ne.s32.totalorder %s44, %s45
    %p56 = scmp.eq.s32.totalorder %s15, 0
    %p57 = por %p55, %p56
    %p58 = scmp.ne.s32.totalorder %s44, %s45
    %p59 = scmp.eq.s32.totalorder %s16, 1
    %p60 = por %p58, %p59
    %p62 = scmp.ne.s32.totalorder %s45, %s61
    %p63 = scmp.eq.s32.totalorder %s16, 0
    %p64 = por %p62, %p63
    %s65 = ssub.s32 %s17, %s36
    %s66 = ssub.s32 %s19, %s28
    %s67 = sor.u32 %s65, %s66
    %p68 = scmp.eq.s32.totalorder %s67, 0
    %s70 = sadd.s32 %s69, 1
    %s71 = scalar_select %p68, %s69, %s70
    %p74 = pneg %p68
    %p75 = scmp.eq.s32.totalorder %s10, 1
    %p76 = por %p74, %p75
    %p77 = scmp.ne.s32.totalorder %s69, %s72
    %p78 = scmp.eq.s32.totalorder %s10, 0
    %p79 = por %p77, %p78
    %p80 = scmp.ne.s32.totalorder %s69, %s72
    %p81 = scmp.eq.s32.totalorder %s15, 1
    %p82 = por %p80, %p81
    %p83 = scmp.ne.s32.totalorder %s72, %s73
    %p84 = scmp.eq.s32.totalorder %s15, 0
    %p85 = por %p83, %p84
    %p86 = scmp.ne.s32.totalorder %s72, %s73
    %p87 = scmp.eq.s32.totalorder %s16, 1
    %p88 = por %p86, %p87
    %p90 = scmp.ne.s32.totalorder %s73, %s89
    %p91 = scmp.eq.s32.totalorder %s16, 0
    %p92 = por %p90, %p91
    %s93 = ssub.s32 %s17, %s36
    %p94 = scmp.eq.s32.totalorder %s93, 0
    %s96 = sadd.s32 %s95, 1
    %s97 = scalar_select %p94, %s95, %s96
    %p100 = pneg %p94
    %p101 = scmp.eq.s32.totalorder %s10, 1
    %p102 = por %p100, %p101
    %p103 = scmp.ne.s32.totalorder %s95, %s98
    %p104 = scmp.eq.s32.totalorder %s10, 0
    %p105 = por %p103, %p104
    %p106 = scmp.ne.s32.totalorder %s95, %s98
    %p107 = scmp.eq.s32.totalorder %s15, 1
    %p108 = por %p106, %p107
    %p109 = scmp.ne.s32.totalorder %s98, %s99
    %p110 = scmp.eq.s32.totalorder %s15, 0
    %p111 = por %p109, %p110
    %p112 = scmp.ne.s32.totalorder %s98, %s99
    %p113 = scmp.eq.s32.totalorder %s16, 1
    %p114 = por %p112, %p113
    %p116 = scmp.ne.s32.totalorder %s99, %s115
    %p117 = scmp.eq.s32.totalorder %s16, 0
    %p118 = por %p116, %p117
    %s119 = ssub.s32 %s17, %s36
    %p120 = scmp.eq.s32.totalorder %s119, 0
    %s122 = sadd.s32 %s121, 1
    %s123 = scalar_select %p120, %s121, %s122
    %p126 = pneg %p120
    %p127 = scmp.eq.s32.totalorder %s10, 1
    %p128 = por %p126, %p127
    %p129 = scmp.ne.s32.totalorder %s121, %s124
    %p130 = scmp.eq.s32.totalorder %s10, 0
    %p131 = por %p129, %p130
    %p132 = scmp.ne.s32.totalorder %s121, %s124
    %p133 = scmp.eq.s32.totalorder %s15, 1
    %p134 = por %p132, %p133
    %p135 = scmp.ne.s32.totalorder %s124, %s125
    %p136 = scmp.eq.s32.totalorder %s15, 0
    %p137 = por %p135, %p136
    %p138 = scmp.ne.s32.totalorder %s124, %s125
    %p139 = scmp.eq.s32.totalorder %s16, 1
    %p140 = por %p138, %p139
    %p142 = scmp.ne.s32.totalorder %s125, %s141
    %p143 = scmp.eq.s32.totalorder %s16, 0
    %p144 = por %p142, %p143
    %p145 = scmp.le.s32.totalorder 1, %s10
    %p146 = scmp.lt.s32.totalorder %s10, 3
    %p147 = pnand %p145, %p146
    %p148 = pneg %p147
    // Predicated region
    $region9: #{tpu_custom_call.1} parent=5 // pred_check
      _
    $region10: #{tpu_custom_call.1} parent=5 // pred_check_branch
      %150 = sbr.rel (%p147) target = $region12
    $region11: #{tpu_custom_call.1} parent=5 // pred_region
      %s151 = ssub.s32 %s10, 1
    $region12: #{tpu_custom_call.1} parent=5 // pred_fallthru
      _
    %p152 = scmp.lt.s32.totalorder %s10, 2
    // Predicated region
    $region13: #{tpu_custom_call.1} parent=5 // pred_check
      %p153 = pneg %p152
    $region14: #{tpu_custom_call.1} parent=5 // pred_check_branch
      %155 = sbr.rel (%p153) target = $region16
    $region15: #{tpu_custom_call.1} parent=5 // pred_region
      // Predicated region
      $region17: #{tpu_custom_call.1} parent=15 // pred_check
        %p156 = pneg %p51
      $region18: #{tpu_custom_call.1} parent=15 // pred_check_branch
        %158 = sbr.rel (%p156) target = $region20
      $region19: #{tpu_custom_call.1} parent=15 // pred_region
        %s159 = smul.u32 8, %s18
        %p160 = scmp.lt.s32.totalorder %s17, 1
        %s161 = scalar_select %p160, %s17, 1
        %p162 = scmp.lt.s32.totalorder %s159, 7
        %s163 = scalar_select %p162, %s159, 7
        %s164 = smul.addr %s161, 8
        %s165 = sadd.s32 %s163, %s164
        %s166 = smul.addr %s165, 8
        %s167 = scalar_lea.vmem %s0, %s166
        %s168 = smul.u32 8, %s18
      $region20: #{tpu_custom_call.1} parent=15 // pred_fallthru
        _
      // Predicated region
      $region21: #{tpu_custom_call.1} parent=15 // pred_check
        %p169 = pneg %p79
      $region22: #{tpu_custom_call.1} parent=15 // pred_check_branch
        %171 = sbr.rel (%p169) target = $region24
      $region23: #{tpu_custom_call.1} parent=15 // pred_region
        %p172 = scmp.lt.s32.totalorder %s17, 1
        %s173 = scalar_select %p172, %s17, 1
        %p174 = scmp.lt.s32.totalorder %s19, 0
        %s175 = scalar_select %p174, %s19, 0
        %s176 = sadd.s32 %s175, %s173
        %s177 = smul.addr %s176, 8
        %s178 = scalar_lea.vmem %s1, %s177
      $region24: #{tpu_custom_call.1} parent=15 // pred_fallthru
        _
    $region16: #{tpu_custom_call.1} parent=5 // pred_fallthru
      _
    %p179 = scmp.le.s32.totalorder 1, %s10
    %p180 = scmp.lt.s32.totalorder %s10, 3
    %p181 = pnand %p179, %p180
    %p182 = pneg %p181
    // Predicated region
    $region25: #{tpu_custom_call.1} parent=5 // pred_check
      _
    $region26: #{tpu_custom_call.1} parent=5 // pred_check_branch
      %184 = sbr.rel (%p181) target = $region28
    $region27: #{tpu_custom_call.1} parent=5 // pred_region
      %s185 = ssub.s32 %s10, 1
      %s186 = smul.u32 8, %s21
      %p187 = scmp.lt.s32.totalorder %s20, 1
      %s188 = scalar_select %p187, %s20, 1
      %p189 = scmp.lt.s32.totalorder %s186, 7
      %s190 = scalar_select %p189, %s186, 7
      %s191 = smul.addr %s188, 8
      %s192 = sadd.s32 %s190, %s191
      %s193 = smul.addr %s192, 8
      %s194 = scalar_lea.vmem %s0, %s193
      %p195 = pneg %p57
      %p196 = pneg %p54
      %p197 = scmp.lt.s32.totalorder %s20, 1
      %s198 = scalar_select %p197, %s20, 1
      %p199 = scmp.lt.s32.totalorder %s22, 0
      %s200 = scalar_select %p199, %s22, 0
      %s201 = sadd.s32 %s200, %s198
      %s202 = smul.addr %s201, 8
      %s203 = scalar_lea.vmem %s1, %s202
      %p204 = pneg %p85
      %p205 = pneg %p82
      %p206 = pneg %p111
      %p207 = pneg %p108
      %p208 = scmp.lt.s32.totalorder %s20, 1
      %s209 = scalar_select %p208, %s20, 1
      %s210 = scalar_lea.vmem %s2, %s209
      %p211 = pneg %p137
      %p212 = pneg %p134
      %p213 = scmp.lt.s32.totalorder %s20, 1
      %s214 = scalar_select %p213, %s20, 1
      %s215 = scalar_lea.vmem %s3, %s214
      %s216 = smul.u32 8, %s21
      %p217 = scmp.lt.s32.totalorder %s20, 1
      %s218 = scalar_select %p217, %s20, 1
      %p219 = scmp.lt.s32.totalorder %s216, 7
      %s220 = scalar_select %p219, %s216, 7
      %s221 = smul.addr %s218, 8
      %s222 = sadd.s32 %s220, %s221
      %s223 = smul.addr %s222, 8
      %s224 = scalar_lea.vmem %s0, %s223
      %s225 = smul.u32 8, %s21
      %p226 = scmp.lt.s32.totalorder %s20, 1
      %s227 = scalar_select %p226, %s20, 1
      %p228 = scmp.lt.s32.totalorder %s22, 0
      %s229 = scalar_select %p228, %s22, 0
      %s230 = sadd.s32 %s229, %s227
      %s231 = smul.addr %s230, 8
      %s232 = scalar_lea.vmem %s1, %s231
      %p233 = scmp.lt.s32.totalorder %s20, 1
      %s234 = scalar_select %p233, %s20, 1
      %s235 = scalar_lea.vmem %s2, %s234
      %p236 = scmp.lt.s32.totalorder %s20, 1
      %s237 = scalar_select %p236, %s20, 1
      %s238 = scalar_lea.vmem %s3, %s237
      %p239 = scmp.eq.s32.totalorder %s21, 0
      %p240 = scmp.eq.s32.totalorder %s22, 0
      %p241 = pnand %p239, %p240
      %p242 = pneg %p241
      // Predicated region
      $region29: #{tpu_custom_call.1} parent=27 // pred_check
        _
      $region30: #{tpu_custom_call.1} parent=27 // pred_check_branch
        %244 = sbr.rel (%p241) target = $region32
      $region31: #{tpu_custom_call.1} parent=27 // pred_region
        %vm245 = vcmask 0
        %246 = vst.msk [vmem:[#allocation6] sm:$0x1] %vm245, 0.0
        %247 = vst.msk [vmem:[#allocation7] sm:$0x1] %vm245, 0.0
      $region32: #{tpu_custom_call.1} parent=27 // pred_fallthru
        _
      // Predicated region
      $region33: #{tpu_custom_call.1} parent=27 // pred_check
        %p248 = pneg %p240
      $region34: #{tpu_custom_call.1} parent=27 // pred_check_branch
        %250 = sbr.rel (%p248) target = $region36
      $region35: #{tpu_custom_call.1} parent=27 // pred_region
        %v251 = vld [vmem:[%s224] sm:$0xff]
        %v252 = vld [vmem:[%s224 + $0x8] sm:$0xff]
        %v253 = vld [vmem:[%s224 + $0x10] sm:$0xff]
        %v254 = vld [vmem:[%s224 + $0x18] sm:$0xff]
        %v255 = vld [vmem:[%s224 + $0x20] sm:$0xff]
        %v256 = vld [vmem:[%s224 + $0x28] sm:$0xff]
        %v257 = vld [vmem:[%s224 + $0x30] sm:$0xff]
        %v258 = vld [vmem:[%s224 + $0x38] sm:$0xff]
        %v259 = vmul.f32 %v251, %v251
        %v260 = vmul.f32 %v252, %v252
        %v261 = vmul.f32 %v253, %v253
        %v262 = vmul.f32 %v254, %v254
        %v263 = vmul.f32 %v255, %v255
        %v264 = vmul.f32 %v256, %v256
        %v265 = vmul.f32 %v257, %v257
        %v266 = vmul.f32 %v258, %v258
        %vm267 = vcmask 64512
        %v268 = vsel %vm267, %v259, 0.0
        %269 = vadd.xlane.f32.xlu0 %v268
        %v270 = vpop.xlane.xlu0 %269
        %v271 = vsel %vm267, %v260, 0.0
        %272 = vadd.xlane.f32.xlu0 %v271
        %v273 = vpop.xlane.xlu0 %272
        %v274 = vsel %vm267, %v261, 0.0
        %275 = vadd.xlane.f32.xlu0 %v274
        %v276 = vpop.xlane.xlu0 %275
        %v277 = vsel %vm267, %v262, 0.0
        %278 = vadd.xlane.f32.xlu0 %v277
        %v279 = vpop.xlane.xlu0 %278
        %v280 = vsel %vm267, %v263, 0.0
        %281 = vadd.xlane.f32.xlu0 %v280
        %v282 = vpop.xlane.xlu0 %281
        %v283 = vsel %vm267, %v264, 0.0
        %284 = vadd.xlane.f32.xlu0 %v283
        %v285 = vpop.xlane.xlu0 %284
        %v286 = vsel %vm267, %v265, 0.0
        %287 = vadd.xlane.f32.xlu0 %v286
        %v288 = vpop.xlane.xlu0 %287
        %v289 = vsel %vm267, %v266, 0.0
        %290 = vadd.xlane.f32.xlu0 %v289
        %v291 = vpop.xlane.xlu0 %290
        %s292 = smul.u32 %s21, 64
        %v293 = vlaneseq
        %v294 = vshrl.u32 %v293, 7
        %v295 = vadd.s32 %v294, 8
        %v296 = vadd.s32 %v294, 16
        %v297 = vadd.s32 %v294, 24
        %v298 = vadd.s32 %v294, 32
        %v299 = vadd.s32 %v294, 40
        %v300 = vadd.s32 %v294, 48
        %v301 = vadd.s32 %v294, 56
        %v302 = vstv %s292
        %v303 = vadd.s32 %v302, %v294
        %v304 = vadd.s32 %v302, %v295
        %v305 = vadd.s32 %v302, %v296
        %v306 = vadd.s32 %v302, %v297
        %v307 = vadd.s32 %v302, %v298
        %v308 = vadd.s32 %v302, %v299
        %v309 = vadd.s32 %v302, %v300
        %v310 = vadd.s32 %v302, %v301
        %vm311 = vcmask 7168
        %312 = vst.msk [vmem:[#allocation4] sm:$0xff] %vm311, %v270
        %313 = vst.msk [vmem:[#allocation4 + $0x8] sm:$0xff] %vm311, %v273
        %314 = vst.msk [vmem:[#allocation4 + $0x10] sm:$0xff] %vm311, %v276
        %315 = vst.msk [vmem:[#allocation4 + $0x18] sm:$0xff] %vm311, %v279
        %316 = vst.msk [vmem:[#allocation4 + $0x20] sm:$0xff] %vm311, %v282
        %317 = vst.msk [vmem:[#allocation4 + $0x28] sm:$0xff] %vm311, %v285
        %318 = vst.msk [vmem:[#allocation4 + $0x30] sm:$0xff] %vm311, %v288
        %319 = vst.msk [vmem:[#allocation4 + $0x38] sm:$0xff] %vm311, %v291
        %vm320 = vcmp.lt.s32.totalorder %v303, 64
        %vm321 = vcmp.lt.s32.totalorder %v304, 64
        %vm322 = vcmp.lt.s32.totalorder %v305, 64
        %vm323 = vcmp.lt.s32.totalorder %v306, 64
        %vm324 = vcmp.lt.s32.totalorder %v307, 64
        %vm325 = vcmp.lt.s32.totalorder %v308, 64
        %vm326 = vcmp.lt.s32.totalorder %v309, 64
        %vm327 = vcmp.lt.s32.totalorder %v310, 64
        %v328 = vsel %vm320, %v270, 1e+30
        %v329 = vsel %vm321, %v273, 1e+30
        %v330 = vsel %vm322, %v276, 1e+30
        %v331 = vsel %vm323, %v279, 1e+30
        %v332 = vsel %vm324, %v282, 1e+30
        %v333 = vsel %vm325, %v285, 1e+30
        %v334 = vsel %vm326, %v288, 1e+30
        %v335 = vsel %vm327, %v291, 1e+30
        %336 = vst.msk [vmem:[#allocation5] sm:$0xff] %vm311, %v328
        %337 = vst.msk [vmem:[#allocation5 + $0x8] sm:$0xff] %vm311, %v329
        %338 = vst.msk [vmem:[#allocation5 + $0x10] sm:$0xff] %vm311, %v330
        %339 = vst.msk [vmem:[#allocation5 + $0x18] sm:$0xff] %vm311, %v331
        %340 = vst.msk [vmem:[#allocation5 + $0x20] sm:$0xff] %vm311, %v332
        %341 = vst.msk [vmem:[#allocation5 + $0x28] sm:$0xff] %vm311, %v333
        %342 = vst.msk [vmem:[#allocation5 + $0x30] sm:$0xff] %vm311, %v334
        %343 = vst.msk [vmem:[#allocation5 + $0x38] sm:$0xff] %vm311, %v335
        %344 = vst.msk [vmem:[#allocation2] sm:$0xff] %vm311, 1e+30
        %345 = vst.msk [vmem:[#allocation2 + $0x8] sm:$0xff] %vm311, 1e+30
        %346 = vst.msk [vmem:[#allocation2 + $0x10] sm:$0xff] %vm311, 1e+30
        %347 = vst.msk [vmem:[#allocation2 + $0x18] sm:$0xff] %vm311, 1e+30
        %348 = vst.msk [vmem:[#allocation2 + $0x20] sm:$0xff] %vm311, 1e+30
        %349 = vst.msk [vmem:[#allocation2 + $0x28] sm:$0xff] %vm311, 1e+30
        %350 = vst.msk [vmem:[#allocation2 + $0x30] sm:$0xff] %vm311, 1e+30
        %351 = vst.msk [vmem:[#allocation2 + $0x38] sm:$0xff] %vm311, 1e+30
      $region36: #{tpu_custom_call.1} parent=27 // pred_fallthru
        _
      // Predicated region
      $region37: #{tpu_custom_call.1} parent=27 // pred_check
        %p352 = pneg %p239
      $region38: #{tpu_custom_call.1} parent=27 // pred_check_branch
        %354 = sbr.rel (%p352) target = $region40
      $region39: #{tpu_custom_call.1} parent=27 // pred_region
        %s355 = scalar_lea.vmem [#allocation3], %s22
        %356 = vst [vmem:[%s355] sm:$0x1] 1e+30
      $region40: #{tpu_custom_call.1} parent=27 // pred_fallthru
        _
      %v357 = vld [vmem:[%s224] sm:$0xff]
      %v358 = vld [vmem:[%s224 + $0x8] sm:$0xff]
      %v359 = vld [vmem:[%s224 + $0x10] sm:$0xff]
      %v360 = vld [vmem:[%s224 + $0x18] sm:$0xff]
      %v361 = vld [vmem:[%s224 + $0x20] sm:$0xff]
      %v362 = vld [vmem:[%s224 + $0x28] sm:$0xff]
      %v363 = vld [vmem:[%s224 + $0x30] sm:$0xff]
      %v364 = vld [vmem:[%s224 + $0x38] sm:$0xff]
      %v365 = vmul.f32 %v357, 2.0
      %v366 = vmul.f32 %v358, 2.0
      %v367 = vmul.f32 %v359, 2.0
      %v368 = vmul.f32 %v360, 2.0
      %v369 = vmul.f32 %v361, 2.0
      %v370 = vmul.f32 %v362, 2.0
      %v371 = vmul.f32 %v363, 2.0
      %v372 = vmul.f32 %v364, 2.0
      %v373 = vld [vmem:[#allocation5] sm:$0xff]
      %v374 = vld [vmem:[#allocation5 + $0x8] sm:$0xff]
      %v375 = vld [vmem:[#allocation5 + $0x10] sm:$0xff]
      %v376 = vld [vmem:[#allocation5 + $0x18] sm:$0xff]
      %v377 = vld [vmem:[#allocation5 + $0x20] sm:$0xff]
      %v378 = vld [vmem:[#allocation5 + $0x28] sm:$0xff]
      %v379 = vld [vmem:[#allocation5 + $0x30] sm:$0xff]
      %v380 = vld [vmem:[#allocation5 + $0x38] sm:$0xff]
      %v381 = vld [vmem:[#allocation2] sm:$0xff]
      %v382 = vld [vmem:[#allocation2 + $0x8] sm:$0xff]
      %v383 = vld [vmem:[#allocation2 + $0x10] sm:$0xff]
      %v384 = vld [vmem:[#allocation2 + $0x18] sm:$0xff]
      %v385 = vld [vmem:[#allocation2 + $0x20] sm:$0xff]
      %v386 = vld [vmem:[#allocation2 + $0x28] sm:$0xff]
      %v387 = vld [vmem:[#allocation2 + $0x30] sm:$0xff]
      %v388 = vld [vmem:[#allocation2 + $0x38] sm:$0xff]
      %v389 = vld [vmem:[%s232] sm:$0xff]
      %v390 = vmul.f32 %v389, %v389
      %v391 = vrot.slane %v390, 4
      %v392 = vadd.f32 %v390, %v391
      %v393 = vrot.slane %v392, 2
      %v394 = vadd.f32 %v392, %v393
      %v395 = vrot.slane %v394, 1
      %v396 = vadd.f32 %v394, %v395
      %s397 = smul.u32 %s22, 128
      %v398 = vlaneseq
      %v399 = vand.u32 %v398, 127
      %v400 = vstv %s397
      %v401 = vadd.s32 %v400, %v399
      %vm402 = vcmp.lt.s32.totalorder %v401, 48
      %v403 = vsel %vm402, %v396, 1e+30
      %vm404 = vcmask 64512
      %v406 = vsel %vm404, %v365, 0
      %v409 = vsel %vm404, %v366, 0
      %v412 = vsel %vm404, %v367, 0
      %v415 = vsel %vm404, %v368, 0
      %v418 = vsel %vm404, %v369, 0
      %v421 = vsel %vm404, %v370, 0
      %v424 = vsel %vm404, %v371, 0
      %v427 = vsel %vm404, %v372, 0
      %429 = vmatprep.subr.mxu0 0.0
      %430 = vmatpush1.msra.mxu0 0.0
      %431 = vmatprep.subr.mxu0 0.0
      %432 = vmatpush1.msra.mxu0 0.0
      %433 = vmatprep.subr.mxu0 0.0
      %434 = vmatpush1.msra.mxu0 0.0
      %435 = vmatprep.subr.mxu0 0.0
      %436 = vmatpush1.msra.mxu0 0.0
      %437 = vmatprep.subr.mxu0 0.0
      %438 = vmatpush1.msra.mxu0 0.0
      %439 = vmatprep.subr.mxu0 0.0
      %440 = vmatpush1.msra.mxu0 0.0
      %441 = vmatprep.subr.mxu0 0.0
      %442 = vmatpush1.msra.mxu0 0.0
      %443 = vmatprep.subr.mxu0 0.0
      %444 = vmatpush1.msra.mxu0 0.0
      %445 = vmatprep.subr.mxu0 0.0
      %446 = vmatpush1.msra.mxu0 0.0
      %447 = vmatprep.subr.mxu0 0.0
      %448 = vmatpush1.msra.mxu0 0.0
      %449 = vmatprep.subr.mxu0 0.0
      %450 = vmatpush1.msra.mxu0 0.0
      %451 = vmatprep.subr.mxu0 0.0
      %452 = vmatpush1.msra.mxu0 0.0
      %453 = vmatprep.subr.mxu0 0.0
      %454 = vmatpush1.msra.mxu0 0.0
      %455 = vmatprep.subr.mxu0 0.0
      %456 = vmatpush1.msra.mxu0 0.0
      %457 = vmatprep.subr.mxu0 0.0
      %458 = vmatpush1.msra.mxu0 0.0
      %459 = vmatprep.subr.mxu0 0.0
      %460 = vmatpush1.msra.mxu0 %v389
      %461 = vmatprep.subr.mxu0 0.0
      %462 = vmatpush2.msra.mxu0 0.0
      %463 = vmatprep.subr.mxu0 0.0
      %464 = vmatpush2.msra.mxu0 0.0
      %465 = vmatprep.subr.mxu0 0.0
      %466 = vmatpush2.msra.mxu0 0.0
      %467 = vmatprep.subr.mxu0 0.0
      %468 = vmatpush2.msra.mxu0 0.0
      %469 = vmatprep.subr.mxu0 0.0
      %470 = vmatpush2.msra.mxu0 0.0
      %471 = vmatprep.subr.mxu0 0.0
      %472 = vmatpush2.msra.mxu0 0.0
      %473 = vmatprep.subr.mxu0 0.0
      %474 = vmatpush2.msra.mxu0 0.0
      %475 = vmatprep.subr.mxu0 0.0
      %476 = vmatpush2.msra.mxu0 0.0
      %477 = vmatprep.subr.mxu0 0.0
      %478 = vmatpush2.msra.mxu0 0.0
      %479 = vmatprep.subr.mxu0 0.0
      %480 = vmatpush2.msra.mxu0 0.0
      %481 = vmatprep.subr.mxu0 0.0
      %482 = vmatpush2.msra.mxu0 0.0
      %483 = vmatprep.subr.mxu0 0.0
      %484 = vmatpush2.msra.mxu0 0.0
      %485 = vmatprep.subr.mxu0 0.0
      %486 = vmatpush2.msra.mxu0 0.0
      %487 = vmatprep.subr.mxu0 0.0
      %488 = vmatpush2.msra.mxu0 0.0
      %489 = vmatprep.subr.mxu0 0.0
      %490 = vmatpush2.msra.mxu0 0.0
      %491 = vmatprep.subr.mxu0 0.0
      %492 = vmatpush2.msra.mxu0 0.0
      %493 = vmatprep.mubr.f32.mxu0 0.0
      %494 = vmatmul.mubr.f32.gmra.mxu0 %v406
      %v495 = vpop.f32.mrf.mxu0
      %v496 = vadd.f32 0.0, %v495
      %v497 = vpop.f32.mrf.mxu0
      %498 = vmatprep.mubr.f32.mxu0 0.0
      %499 = vmatmul.mubr.f32.gmra.mxu0 %v409
      %v500 = vpop.f32.mrf.mxu0
      %v501 = vadd.f32 0.0, %v500
      %v502 = vpop.f32.mrf.mxu0
      %503 = vmatprep.mubr.f32.mxu0 0.0
      %504 = vmatmul.mubr.f32.gmra.mxu0 %v412
      %v505 = vpop.f32.mrf.mxu0
      %v506 = vadd.f32 0.0, %v505
      %v507 = vpop.f32.mrf.mxu0
      %508 = vmatprep.mubr.f32.mxu0 0.0
      %509 = vmatmul.mubr.f32.gmra.mxu0 %v415
      %v510 = vpop.f32.mrf.mxu0
      %v511 = vadd.f32 0.0, %v510
      %v512 = vpop.f32.mrf.mxu0
      %513 = vmatprep.mubr.f32.mxu0 0.0
      %514 = vmatmul.mubr.f32.gmra.mxu0 %v418
      %v515 = vpop.f32.mrf.mxu0
      %v516 = vadd.f32 0.0, %v515
      %v517 = vpop.f32.mrf.mxu0
      %518 = vmatprep.mubr.f32.mxu0 0.0
      %519 = vmatmul.mubr.f32.gmra.mxu0 %v421
      %v520 = vpop.f32.mrf.mxu0
      %v521 = vadd.f32 0.0, %v520
      %v522 = vpop.f32.mrf.mxu0
      %523 = vmatprep.mubr.f32.mxu0 0.0
      %524 = vmatmul.mubr.f32.gmra.mxu0 %v424
      %v525 = vpop.f32.mrf.mxu0
      %v526 = vadd.f32 0.0, %v525
      %v527 = vpop.f32.mrf.mxu0
      %528 = vmatprep.mubr.f32.mxu0 0.0
      %529 = vmatmul.mubr.f32.gmra.mxu0 %v427
      %v530 = vpop.f32.mrf.mxu0
      %v531 = vadd.f32 0.0, %v530
      %v532 = vpop.f32.mrf.mxu0
      %533 = vdwg.mxu0
      %v534 = vsub.f32 %v403, %v496
      %v535 = vsub.f32 %v403, %v501
      %v536 = vsub.f32 %v403, %v506
      %v537 = vsub.f32 %v403, %v511
      %v538 = vsub.f32 %v403, %v516
      %v539 = vsub.f32 %v403, %v521
      %v540 = vsub.f32 %v403, %v526
      %v541 = vsub.f32 %v403, %v531
      %542 = vmin.xlane.f32.xlu0 %v534
      %v543 = vpop.xlane.xlu0 %542
      %544 = vmin.xlane.f32.xlu0 %v535
      %v545 = vpop.xlane.xlu0 %544
      %546 = vmin.xlane.f32.xlu0 %v536
      %v547 = vpop.xlane.xlu0 %546
      %548 = vmin.xlane.f32.xlu0 %v537
      %v549 = vpop.xlane.xlu0 %548
      %550 = vmin.xlane.f32.xlu0 %v538
      %v551 = vpop.xlane.xlu0 %550
      %552 = vmin.xlane.f32.xlu0 %v539
      %v553 = vpop.xlane.xlu0 %552
      %554 = vmin.xlane.f32.xlu0 %v540
      %v555 = vpop.xlane.xlu0 %554
      %556 = vmin.xlane.f32.xlu0 %v541
      %v557 = vpop.xlane.xlu0 %556
      %v558 = vmin.f32 %v381, %v543
      %v559 = vmin.f32 %v382, %v545
      %v560 = vmin.f32 %v383, %v547
      %v561 = vmin.f32 %v384, %v549
      %v562 = vmin.f32 %v385, %v551
      %v563 = vmin.f32 %v386, %v553
      %v564 = vmin.f32 %v387, %v555
      %v565 = vmin.f32 %v388, %v557
      %567 = vset.pattern.permute.xlu0 0
      %568 = vperm.xlu0 %567, %v373
      %v569 = vpop.permute.xlu0 %568
      %572 = vset.pattern.permute.xlu0 0
      %573 = vperm.xlu0 %572, %v374
      %v574 = vpop.permute.xlu0 %573
      %577 = vset.pattern.permute.xlu0 0
      %578 = vperm.xlu0 %577, %v375
      %v579 = vpop.permute.xlu0 %578
      %582 = vset.pattern.permute.xlu0 0
      %583 = vperm.xlu0 %582, %v376
      %v584 = vpop.permute.xlu0 %583
      %587 = vset.pattern.permute.xlu0 0
      %588 = vperm.xlu0 %587, %v377
      %v589 = vpop.permute.xlu0 %588
      %592 = vset.pattern.permute.xlu0 0
      %593 = vperm.xlu0 %592, %v378
      %v594 = vpop.permute.xlu0 %593
      %597 = vset.pattern.permute.xlu0 0
      %598 = vperm.xlu0 %597, %v379
      %v599 = vpop.permute.xlu0 %598
      %602 = vset.pattern.permute.xlu0 0
      %603 = vperm.xlu0 %602, %v380
      %v604 = vpop.permute.xlu0 %603
      %v606 = vsub.f32 %v569, %v496
      %v607 = vsub.f32 %v574, %v501
      %v608 = vsub.f32 %v579, %v506
      %v609 = vsub.f32 %v584, %v511
      %v610 = vsub.f32 %v589, %v516
      %v611 = vsub.f32 %v594, %v521
      %v612 = vsub.f32 %v599, %v526
      %v613 = vsub.f32 %v604, %v531
      %v614 = vmin.f32 %v606, %v610
      %v615 = vmin.f32 %v607, %v611
      %v616 = vmin.f32 %v608, %v612
      %v617 = vmin.f32 %v609, %v613
      %v618 = vmin.f32 %v614, %v615
      %v619 = vmin.f32 %v616, %v617
      %v620 = vmin.f32 %v618, %v619
      %v621 = vrot.slane %v620, 4
      %v622 = vmin.f32 %v620, %v621
      %v623 = vrot.slane %v622, 2
      %v624 = vmin.f32 %v622, %v623
      %v625 = vrot.slane %v624, 1
      %v626 = vmin.f32 %v624, %v625
      %s627 = scalar_lea.vmem [#allocation3], %s22
      %v628 = vld [vmem:[%s627] sm:$0x1]
      %v629 = vmin.f32 %v628, %v626
      %630 = vst [vmem:[%s627] sm:$0x1] %v629
      %vm631 = vcmask 7168
      %632 = vst.msk [vmem:[#allocation2] sm:$0xff] %vm631, %v558
      %633 = vst.msk [vmem:[#allocation2 + $0x8] sm:$0xff] %vm631, %v559
      %634 = vst.msk [vmem:[#allocation2 + $0x10] sm:$0xff] %vm631, %v560
      %635 = vst.msk [vmem:[#allocation2 + $0x18] sm:$0xff] %vm631, %v561
      %636 = vst.msk [vmem:[#allocation2 + $0x20] sm:$0xff] %vm631, %v562
      %637 = vst.msk [vmem:[#allocation2 + $0x28] sm:$0xff] %vm631, %v563
      %638 = vst.msk [vmem:[#allocation2 + $0x30] sm:$0xff] %vm631, %v564
      %639 = vst.msk [vmem:[#allocation2 + $0x38] sm:$0xff] %vm631, %v565
      // Predicated region
      $region41: #{tpu_custom_call.1} parent=27 // pred_check
        %p640 = pneg %p240
      $region42: #{tpu_custom_call.1} parent=27 // pred_check_branch
        %642 = sbr.rel (%p640) target = $region44
      $region43: #{tpu_custom_call.1} parent=27 // pred_region
        %s643 = smul.u32 %s21, 64
        %v644 = vlaneseq
        %v645 = vshrl.u32 %v644, 7
        %v646 = vadd.s32 %v645, 8
        %v647 = vadd.s32 %v645, 16
        %v648 = vadd.s32 %v645, 24
        %v649 = vadd.s32 %v645, 32
        %v650 = vadd.s32 %v645, 40
        %v651 = vadd.s32 %v645, 48
        %v652 = vadd.s32 %v645, 56
        %v653 = vstv %s643
        %v654 = vadd.s32 %v653, %v645
        %v655 = vadd.s32 %v653, %v646
        %v656 = vadd.s32 %v653, %v647
        %v657 = vadd.s32 %v653, %v648
        %v658 = vadd.s32 %v653, %v649
        %v659 = vadd.s32 %v653, %v650
        %v660 = vadd.s32 %v653, %v651
        %v661 = vadd.s32 %v653, %v652
        %v662 = vld [vmem:[#allocation4] sm:$0xff]
        %v663 = vld [vmem:[#allocation4 + $0x8] sm:$0xff]
        %v664 = vld [vmem:[#allocation4 + $0x10] sm:$0xff]
        %v665 = vld [vmem:[#allocation4 + $0x18] sm:$0xff]
        %v666 = vld [vmem:[#allocation4 + $0x20] sm:$0xff]
        %v667 = vld [vmem:[#allocation4 + $0x28] sm:$0xff]
        %v668 = vld [vmem:[#allocation4 + $0x30] sm:$0xff]
        %v669 = vld [vmem:[#allocation4 + $0x38] sm:$0xff]
        %v670 = vld [vmem:[#allocation2] sm:$0xff]
        %v671 = vld [vmem:[#allocation2 + $0x8] sm:$0xff]
        %v672 = vld [vmem:[#allocation2 + $0x10] sm:$0xff]
        %v673 = vld [vmem:[#allocation2 + $0x18] sm:$0xff]
        %v674 = vld [vmem:[#allocation2 + $0x20] sm:$0xff]
        %v675 = vld [vmem:[#allocation2 + $0x28] sm:$0xff]
        %v676 = vld [vmem:[#allocation2 + $0x30] sm:$0xff]
        %v677 = vld [vmem:[#allocation2 + $0x38] sm:$0xff]
        %v678 = vadd.f32 %v662, %v670
        %v679 = vadd.f32 %v663, %v671
        %v680 = vadd.f32 %v664, %v672
        %v681 = vadd.f32 %v665, %v673
        %v682 = vadd.f32 %v666, %v674
        %v683 = vadd.f32 %v667, %v675
        %v684 = vadd.f32 %v668, %v676
        %v685 = vadd.f32 %v669, %v677
        %v686 = vmax.f32 %v678, 0.0
        %v687 = vmax.f32 %v679, 0.0
        %v688 = vmax.f32 %v680, 0.0
        %v689 = vmax.f32 %v681, 0.0
        %v690 = vmax.f32 %v682, 0.0
        %v691 = vmax.f32 %v683, 0.0
        %v692 = vmax.f32 %v684, 0.0
        %v693 = vmax.f32 %v685, 0.0
        %vm694 = vcmp.lt.s32.totalorder %v654, 64
        %vm695 = vcmp.lt.s32.totalorder %v655, 64
        %vm696 = vcmp.lt.s32.totalorder %v656, 64
        %vm697 = vcmp.lt.s32.totalorder %v657, 64
        %vm698 = vcmp.lt.s32.totalorder %v658, 64
        %vm699 = vcmp.lt.s32.totalorder %v659, 64
        %vm700 = vcmp.lt.s32.totalorder %v660, 64
        %vm701 = vcmp.lt.s32.totalorder %v661, 64
        %v702 = vrsqrt.pop %v686
        %v703 = vmul.f32 %v686, %v702
        %vm704 = vcmp.eq.f32.partialorder %v686, inf
        %v705 = vsel %vm704, %v686, %v703
        %vm706 = vcmp.eq.f32.partialorder %v686, 0.0
        %v707 = vand.u32 %v686, 2147483648
        %v708 = vsel %vm706, %v707, %v705
        %v709 = vrsqrt.pop %v687
        %v710 = vmul.f32 %v687, %v709
        %vm711 = vcmp.eq.f32.partialorder %v687, inf
        %v712 = vsel %vm711, %v687, %v710
        %vm713 = vcmp.eq.f32.partialorder %v687, 0.0
        %v714 = vand.u32 %v687, 2147483648
        %v715 = vsel %vm713, %v714, %v712
        %v716 = vrsqrt.pop %v688
        %v717 = vmul.f32 %v688, %v716
        %vm718 = vcmp.eq.f32.partialorder %v688, inf
        %v719 = vsel %vm718, %v688, %v717
        %vm720 = vcmp.eq.f32.partialorder %v688, 0.0
        %v721 = vand.u32 %v688, 2147483648
        %v722 = vsel %vm720, %v721, %v719
        %v723 = vrsqrt.pop %v689
        %v724 = vmul.f32 %v689, %v723
        %vm725 = vcmp.eq.f32.partialorder %v689, inf
        %v726 = vsel %vm725, %v689, %v724
        %vm727 = vcmp.eq.f32.partialorder %v689, 0.0
        %v728 = vand.u32 %v689, 2147483648
        %v729 = vsel %vm727, %v728, %v726
        %v730 = vrsqrt.pop %v690
        %v731 = vmul.f32 %v690, %v730
        %vm732 = vcmp.eq.f32.partialorder %v690, inf
        %v733 = vsel %vm732, %v690, %v731
        %vm734 = vcmp.eq.f32.partialorder %v690, 0.0
        %v735 = vand.u32 %v690, 2147483648
        %v736 = vsel %vm734, %v735, %v733
        %v737 = vrsqrt.pop %v691
        %v738 = vmul.f32 %v691, %v737
        %vm739 = vcmp.eq.f32.partialorder %v691, inf
        %v740 = vsel %vm739, %v691, %v738
        %vm741 = vcmp.eq.f32.partialorder %v691, 0.0
        %v742 = vand.u32 %v691, 2147483648
        %v743 = vsel %vm741, %v742, %v740
        %v744 = vrsqrt.pop %v692
        %v745 = vmul.f32 %v692, %v744
        %vm746 = vcmp.eq.f32.partialorder %v692, inf
        %v747 = vsel %vm746, %v692, %v745
        %vm748 = vcmp.eq.f32.partialorder %v692, 0.0
        %v749 = vand.u32 %v692, 2147483648
        %v750 = vsel %vm748, %v749, %v747
        %v751 = vrsqrt.pop %v693
        %v752 = vmul.f32 %v693, %v751
        %vm753 = vcmp.eq.f32.partialorder %v693, inf
        %v754 = vsel %vm753, %v693, %v752
        %vm755 = vcmp.eq.f32.partialorder %v693, 0.0
        %v756 = vand.u32 %v693, 2147483648
        %v757 = vsel %vm755, %v756, %v754
        %v758 = vsel %vm694, %v708, 0.0
        %v759 = vsel %vm695, %v715, 0.0
        %v760 = vsel %vm696, %v722, 0.0
        %v761 = vsel %vm697, %v729, 0.0
        %v762 = vsel %vm698, %v736, 0.0
        %v763 = vsel %vm699, %v743, 0.0
        %v764 = vsel %vm700, %v750, 0.0
        %v765 = vsel %vm701, %v757, 0.0
        %v766 = vld [vmem:[#allocation6] sm:$0x1]
        %v767 = vsel %vm631, %v758, 0.0
        %v768 = vsel %vm631, %v759, 0.0
        %v769 = vadd.f32 %v767, %v768
        %v770 = vsel %vm631, %v760, 0.0
        %v771 = vadd.f32 %v769, %v770
        %v772 = vsel %vm631, %v761, 0.0
        %v773 = vadd.f32 %v771, %v772
        %v774 = vsel %vm631, %v762, 0.0
        %v775 = vadd.f32 %v773, %v774
        %v776 = vsel %vm631, %v763, 0.0
        %v777 = vadd.f32 %v775, %v776
        %v778 = vsel %vm631, %v764, 0.0
        %v779 = vadd.f32 %v777, %v778
        %v780 = vsel %vm631, %v765, 0.0
        %v781 = vadd.f32 %v779, %v780
        %v782 = vrot.slane %v781, 4
        %v783 = vadd.f32 %v781, %v782
        %v784 = vrot.slane %v783, 2
        %v785 = vadd.f32 %v783, %v784
        %v786 = vrot.slane %v785, 1
        %v787 = vadd.f32 %v785, %v786
        %v788 = vadd.f32 %v766, %v787
        %vm789 = vcmask 0
        %790 = vst.msk [vmem:[#allocation6] sm:$0x1] %vm789, %v788
      $region44: #{tpu_custom_call.1} parent=27 // pred_fallthru
        _
      // Predicated region
      $region45: #{tpu_custom_call.1} parent=27 // pred_check
        %p791 = pneg %p239
      $region46: #{tpu_custom_call.1} parent=27 // pred_check_branch
        %793 = sbr.rel (%p791) target = $region48
      $region47: #{tpu_custom_call.1} parent=27 // pred_region
        %v794 = vld [vmem:[%s232] sm:$0xff]
        %v795 = vmul.f32 %v794, %v794
        %v796 = vrot.slane %v795, 4
        %v797 = vadd.f32 %v795, %v796
        %v798 = vrot.slane %v797, 2
        %v799 = vadd.f32 %v797, %v798
        %v800 = vrot.slane %v799, 1
        %v801 = vadd.f32 %v799, %v800
        %v802 = vld [vmem:[%s627] sm:$0x1]
        %v803 = vadd.f32 %v801, %v802
        %v804 = vmax.f32 %v803, 0.0
        %v805 = vrsqrt.pop %v804
        %v806 = vmul.f32 %v804, %v805
        %vm807 = vcmp.eq.f32.partialorder %v804, inf
        %v808 = vsel %vm807, %v804, %v806
        %vm809 = vcmp.eq.f32.partialorder %v804, 0.0
        %v810 = vand.u32 %v804, 2147483648
        %v811 = vsel %vm809, %v810, %v808
        %v812 = vsel %vm402, %v811, 0.0
        %vm813 = vcmask 1040384
        %v814 = vsel %vm813, %v812, 0.0
        %815 = vadd.xlane.f32.xlu0 %v814
        %v816 = vpop.xlane.xlu0 %815
        %v817 = vadd.f32 %v816, 0.0
        %v818 = vld [vmem:[#allocation7] sm:$0x1]
        %v819 = vadd.f32 %v818, %v817
        %vm820 = vcmask 0
        %821 = vst.msk [vmem:[#allocation7] sm:$0x1] %vm820, %v819
      $region48: #{tpu_custom_call.1} parent=27 // pred_fallthru
        _
      // Predicated region
      $region49: #{tpu_custom_call.1} parent=27 // pred_check
        _
      $region50: #{tpu_custom_call.1} parent=27 // pred_check_branch
        %823 = sbr.rel (%p241) target = $region52
      $region51: #{tpu_custom_call.1} parent=27 // pred_region
        %v824 = vld [vmem:[#allocation6] sm:$0x1]
        %vm825 = vcmask 0
        %826 = vst.msk [vmem:[%s235] sm:$0x1] %vm825, %v824
        %v827 = vld [vmem:[#allocation7] sm:$0x1]
        %828 = vst.msk [vmem:[%s238] sm:$0x1] %vm825, %v827
      $region52: #{tpu_custom_call.1} parent=27 // pred_fallthru
        _
      %p829 = scmp.lt.s32.totalorder %s20, 1
      %s830 = scalar_select %p829, %s20, 1
      %s831 = scalar_lea.vmem %s2, %s830
      %p832 = scmp.lt.s32.totalorder %s20, 1
      %s833 = scalar_select %p832, %s20, 1
      %s834 = scalar_lea.vmem %s3, %s833
      // Predicated region
      $region53: #{tpu_custom_call.1} parent=27 // pred_check
        %p835 = pneg %p108
      $region54: #{tpu_custom_call.1} parent=27 // pred_check_branch
        %837 = sbr.rel (%p835) target = $region56
      $region55: #{tpu_custom_call.1} parent=27 // pred_region
        _
      $region56: #{tpu_custom_call.1} parent=27 // pred_fallthru
        _
      // Predicated region
      $region57: #{tpu_custom_call.1} parent=27 // pred_check
        %p838 = pneg %p134
      $region58: #{tpu_custom_call.1} parent=27 // pred_check_branch
        %840 = sbr.rel (%p838) target = $region60
      $region59: #{tpu_custom_call.1} parent=27 // pred_region
        _
      $region60: #{tpu_custom_call.1} parent=27 // pred_fallthru
        _
    $region28: #{tpu_custom_call.1} parent=5 // pred_fallthru
      _
    %p841 = scmp.le.s32.totalorder 2, %s10
    // Predicated region
    $region61: #{tpu_custom_call.1} parent=5 // pred_check
      %p842 = pneg %p841
    $region62: #{tpu_custom_call.1} parent=5 // pred_check_branch
      %844 = sbr.rel (%p842) target = $region64
    $region63: #{tpu_custom_call.1} parent=5 // pred_region
      %s845 = ssub.s32 %s10, 2
      // Predicated region
      $region65: #{tpu_custom_call.1} parent=63 // pred_check
        %p846 = pneg %p114
      $region66: #{tpu_custom_call.1} parent=63 // pred_check_branch
        %848 = sbr.rel (%p846) target = $region68
      $region67: #{tpu_custom_call.1} parent=63 // pred_region
        %p849 = scmp.lt.s32.totalorder %s23, 1
        %s850 = scalar_select %p849, %s23, 1
        %s851 = scalar_lea.vmem %s2, %s850
      $region68: #{tpu_custom_call.1} parent=63 // pred_fallthru
        _
      // Predicated region
      $region69: #{tpu_custom_call.1} parent=63 // pred_check
        %p852 = pneg %p140
      $region70: #{tpu_custom_call.1} parent=63 // pred_check_branch
        %854 = sbr.rel (%p852) target = $region72
      $region71: #{tpu_custom_call.1} parent=63 // pred_region
        %p855 = scmp.lt.s32.totalorder %s23, 1
        %s856 = scalar_select %p855, %s23, 1
        %s857 = scalar_lea.vmem %s3, %s856
      $region72: #{tpu_custom_call.1} parent=63 // pred_fallthru
        _
    $region64: #{tpu_custom_call.1} parent=5 // pred_fallthru
      _
  $region6: #{tpu_custom_call.1} parent=0 // loop_footer
    %s14 = sadd.s32 1, %s10
  $region7: #{tpu_custom_call.1} parent=0 // loop_footer_branch
    %9 = sbr.rel target = $region3
  $region8: #{tpu_custom_call.1} parent=0 // loop_exit
    _

</llo_original>
